<compile_context>
chip_gen: v7x
topology: tpu7x:2x2x1
jax: 0.10.0
libtpu: 0.0.40
codegen_flags: <defaults>
</compile_context>

<pallas_src>
import jax
import jax.numpy as jnp
from jax.experimental import pallas as pl
from jax.experimental.pallas import tpu as pltpu


def _round_up(x, m):
    return (x + m - 1) // m * m


def _outer_prop_kernel(gathered_ref, node_ref, wf_nd_ref, out_ref):
    # out = (he_emb[e] @ W_f[:in_dim]) + node_emb @ W_f[in_dim:]
    # The first term was gathered in the wrapper; here: one bf16 MXU matmul (f32 acc),
    # one VPU add, one unmasked lane-dense store.
    u = jnp.dot(node_ref[...], wf_nd_ref[...], preferred_element_type=jnp.float32)
    out_ref[...] = u + gathered_ref[...].astype(jnp.float32)


def outer_propagation(node_emb, sl_emb, he_emb, semalinks, W_a, W_f, *, block_nodes=512):
    N, in_dim = node_emb.shape
    S = sl_emb.shape[0]
    E = he_emb.shape[0]
    L = semalinks.shape[0]
    out_dim = W_f.shape[1]
    del W_a  # length-1 softmax == 1.0 -> the W_a/tanh/softmax path contributes nothing.

    # ---- wrapper prepass: validity + last-write-wins dedup (pure JAX, O(L)) ----
    sl = semalinks.astype(jnp.int32)
    n_col, s_col, e_col = sl[:, 0], sl[:, 1], sl[:, 2]
    valid = ((n_col >= 0) & (n_col < N) &
             (s_col >= 0) & (s_col < S) &
             (e_col >= 0) & (e_col < E))
    order = jnp.arange(L, dtype=jnp.int32)
    order_v = jnp.where(valid, order, jnp.int32(-1))
    n_safe = jnp.where(valid, n_col, 0)
    # Index of the final valid link targeting each node (-1 if none) == last write wins.
    last_link = jnp.full((N,), -1, jnp.int32).at[n_safe].max(order_v)
    has_link = last_link >= 0
    link_safe = jnp.where(has_link, last_link, 0)
    e_for_node = jnp.where(has_link, e_col[link_safe], 0)

    # ---- hoisted hyperedge path: project the table once, gather rows with XLA ----
    wf = W_f.astype(jnp.float32)
    he_proj = jnp.dot(he_emb.astype(jnp.float32), wf[:in_dim])            # (E, out_dim)
    gathered = jnp.where(has_link[:, None], he_proj[e_for_node], 0.0)     # (N, out_dim)
    # Mask folded into the inputs: no-link rows contribute zero from both terms.
    node_masked = node_emb.astype(jnp.float32) * has_link[:, None].astype(jnp.float32)

    # ---- padding: 8-aligned node tiles, lane-dense (multiple of 128) output lanes ----
    TN = min(block_nodes, _round_up(max(N, 1), 8))   # big tiles for real N, tight for toys
    N_pad = _round_up(max(N, 1), TN)
    out_pad = _round_up(out_dim, 128)

    bf16 = jnp.bfloat16
    node_p = jnp.zeros((N_pad, in_dim), bf16).at[:N].set(node_masked.astype(bf16))
    gath_p = jnp.zeros((N_pad, out_pad), bf16).at[:N, :out_dim].set(gathered.astype(bf16))
    wf_nd = jnp.zeros((in_dim, out_pad), bf16).at[:, :out_dim].set(wf[in_dim:].astype(bf16))

    out_full = pl.pallas_call(
        _outer_prop_kernel,
        out_shape=jax.ShapeDtypeStruct((N_pad, out_pad), jnp.float32),
        grid=(N_pad // TN,),
        in_specs=[
            pl.BlockSpec((TN, out_pad), lambda i: (i, 0)),      # gathered he-projection tile
            pl.BlockSpec((TN, in_dim), lambda i: (i, 0)),       # masked node embedding tile
            pl.BlockSpec((in_dim, out_pad), lambda i: (0, 0)),  # W_f[in_dim:] (constant block)
        ],
        out_specs=pl.BlockSpec((TN, out_pad), lambda i: (i, 0)),
        compiler_params=pltpu.CompilerParams(
            dimension_semantics=("parallel",),                  # tiles independent after dedup
        ),
    )(gath_p, node_p, wf_nd)

    return out_full[:N, :out_dim]


def reference(node_emb, sl_emb, he_emb, links, W_a, W_f):
    """Pure-JAX transcription of the PyTorch forward loop (full gamma path, f32)."""
    N = node_emb.shape[0]
    out = jnp.zeros((N, W_f.shape[1]), jnp.float32)
    for n, s, e in links:
        if n >= node_emb.shape[0] or e >= he_emb.shape[0] or s >= sl_emb.shape[0]:
            continue
        ne = node_emb[n]
        se = sl_emb[s]
        hee = he_emb[e]
        r_h = ne[None, :] @ W_a
        r_t = hee[None, :] @ W_a
        g = (r_h @ jnp.tanh(r_t + se[None, :]).T).squeeze(0)     # (1,)
        g = jax.nn.softmax(g, axis=0)                            # == [1.0]
        f_i = jnp.sum(g[None, :] * hee, axis=0)                  # (in_dim,)
        u = jnp.concatenate([f_i, ne], axis=0)[None, :] @ W_f    # (1, out_dim)
        out = out.at[n].set(u[0])
    return out


if __name__ == "__main__":
    in_dim, signal_dim, out_dim = 8, 8, 16
    N, S, E = 8, 8, 8

    key = jax.random.PRNGKey(0)
    k = jax.random.split(key, 5)
    node_emb = jax.random.normal(k[0], (N, in_dim), jnp.float32)
    sl_emb = jax.random.normal(k[1], (S, signal_dim), jnp.float32)
    he_emb = jax.random.normal(k[2], (E, in_dim), jnp.float32)
    W_a = jax.random.normal(k[3], (in_dim, signal_dim), jnp.float32)
    W_f = jax.random.normal(k[4], (2 * in_dim, out_dim), jnp.float32)

    # (node_idx, semalink_idx, hyperedge_idx); includes out-of-bounds rows
    # (skipped) and duplicate node indices (last write wins).
    links = [
        (0, 0, 0),
        (1, 1, 2),
        (2, 2, 3),
        (3, 4, 6),
        (0, 3, 5),    # overwrites node 0
        (4, 0, 1),
        (9, 0, 0),    # node OOB      -> skipped
        (2, 12, 1),   # semalink OOB  -> skipped
        (5, 1, 11),   # hyperedge OOB -> skipped
        (1, 2, 4),    # overwrites node 1
    ]
    semalinks = jnp.array(links, dtype=jnp.int32)

    out = outer_propagation(node_emb, sl_emb, he_emb, semalinks, W_a, W_f)
    out = jax.block_until_ready(out)

    ref = reference(node_emb, sl_emb, he_emb, links, W_a, W_f)
    assert out.shape == (N, out_dim)
    # Tolerance loosened vs f32: MXU operands and the gathered he-projection stream are
    # bf16 (per the perf review); accumulation stays f32.
    assert jnp.allclose(out, ref, atol=5e-2, rtol=2e-2), (
        f"max abs err {jnp.max(jnp.abs(out - ref))}")

    print("KERNEL_OK")
</pallas_src>

<mosaic_0001>
module attributes {stable_mosaic.version = 11 : i64} {
  func.func @_outer_prop_kernel(%arg0: i32, %arg1: memref<8x128xbf16, #tpu.memory_space<vmem>>, %arg2: memref<8x8xbf16, #tpu.memory_space<vmem>>, %arg3: memref<8x128xbf16, #tpu.memory_space<vmem>>, %arg4: memref<8x128xf32, #tpu.memory_space<vmem>>) attributes {dimension_semantics = [#tpu.dimension_semantics<parallel>], iteration_bounds = array<i64: 1>, scalar_prefetch = 0 : i64, scratch_operands = 0 : i64, tpu.core_type = #tpu.core_type<tc>, window_params = [{transform_indices = @transform_0, window_bounds = array<i64: 8, 128>}, {transform_indices = @transform_1, window_bounds = array<i64: 8, 8>}, {pipeline_mode = #tpu.pipeline_mode<synchronous>, transform_indices = @transform_2, window_bounds = array<i64: 8, 128>}, {transform_indices = @transform_3, window_bounds = array<i64: 8, 128>}]} {
    %c0 = arith.constant 0 : index
    %c0_0 = arith.constant 0 : index
    %0 = vector.load %arg2[%c0, %c0_0] : memref<8x8xbf16, #tpu.memory_space<vmem>>, vector<8x8xbf16>
    %c0_1 = arith.constant 0 : index
    %c0_2 = arith.constant 0 : index
    %1 = vector.load %arg3[%c0_1, %c0_2] : memref<8x128xbf16, #tpu.memory_space<vmem>>, vector<8x128xbf16>
    %cst = arith.constant dense<0.000000e+00> : vector<8x128xf32>
    %2 = tpu.matmul %0, %1, %cst {dimension_numbers = #tpu.dot_dimension_numbers<[1], [0], [0], [1], [0, 0, 1, 1], [], []>} : vector<8x8xbf16>, vector<8x128xbf16>, vector<8x128xf32> -> vector<8x128xf32>
    %c0_3 = arith.constant 0 : index
    %c0_4 = arith.constant 0 : index
    %3 = vector.load %arg1[%c0_3, %c0_4] : memref<8x128xbf16, #tpu.memory_space<vmem>>, vector<8x128xbf16>
    %4 = arith.extf %3 : vector<8x128xbf16> to vector<8x128xf32>
    %5 = arith.addf %2, %4 : vector<8x128xf32>
    %c0_5 = arith.constant 0 : index
    %c0_6 = arith.constant 0 : index
    %6 = vector.load %arg4[%c0_5, %c0_6] : memref<8x128xf32, #tpu.memory_space<vmem>>, vector<8x128xf32>
    tpu.vector_store %arg4[%c0_5, %c0_6], %5 {strides = array<i32>} : memref<8x128xf32, #tpu.memory_space<vmem>>, vector<8x128xf32>,
    return
  }
  func.func @transform_0(%arg0: i32) -> (i32, i32) {
    %c0_i32 = arith.constant 0 : i32
    %c0_i32_0 = arith.constant 0 : i32
    return %arg0, %c0_i32 : i32, i32
  }
  func.func @transform_1(%arg0: i32) -> (i32, i32) {
    %c0_i32 = arith.constant 0 : i32
    %c0_i32_0 = arith.constant 0 : i32
    return %arg0, %c0_i32 : i32, i32
  }
  func.func @transform_2(%arg0: i32) -> (i32, i32) {
    %c0_i32 = arith.constant 0 : i32
    %c0_i32_0 = arith.constant 0 : i32
    %c0_i32_1 = arith.constant 0 : i32
    return %c0_i32, %c0_i32_0 : i32, i32
  }
  func.func @transform_3(%arg0: i32) -> (i32, i32) {
    %c0_i32 = arith.constant 0 : i32
    %c0_i32_0 = arith.constant 0 : i32
    return %arg0, %c0_i32 : i32, i32
  }
}

</mosaic_0001>

<llo_original>
// kernel: tpu_custom_call.1
$region0: #{tpu_custom_call.1}
  #allocation0 [shape = 'u32[]', space=smem, size = 0x4, offset = 0x4, fixed_abs, tag = 'smem constant byte address 0x4 - core index']
  #allocation1 [shape = 'u32[144,128]{1,0:T(1,128)}', space=vmem, size = 0x12000, scoped, tag = 'internal scratch']
  %s0 = inlined_call_operand.hbm [shape: bf16[8,128], index: 0, kind: input, shape index: {}]
  %s1 = inlined_call_operand.hbm [shape: bf16[8,8], index: 1, kind: input, shape index: {}]
  %s2 = inlined_call_operand.vmem [shape: bf16[8,128], index: 2, kind: input, shape index: {}]
  %s3 = inlined_call_operand.hbm [shape: f32[8,128], index: 3, kind: output, shape index: {}]
  %s4 = sld [smem:[#allocation0]]
  $region30: #{tpu_custom_call.1} parent=0
    _
  %s6 = ssub.s32 1, %s4
  %s7 = scalar_select 0, %s6, %s4
  $region1: #{tpu_custom_call.1} parent=0
    #allocation2 [shape = 'u8[2048]{0}', space=vmem, size = 0x800, scoped, tag = 'input window, operand 0, single buffered']
    #allocation3 [shape = 's32[1]{0}', space=sflag, size = 0x4, scoped, tag = 'scoped memory for tpu_custom_call.1']
    #allocation4 [shape = 's32[1]{0}', space=sflag, size = 0x4, scoped, tag = 'scoped memory for tpu_custom_call.1']
    #allocation5 [shape = 'u8[2048]{0}', space=vmem, size = 0x800, scoped, tag = 'input window, operand 1, single buffered']
    #allocation6 [shape = 's32[1]{0}', space=sflag, size = 0x4, scoped, tag = 'scoped memory for tpu_custom_call.1']
    #allocation7 [shape = 'u8[4096]{0}', space=vmem, size = 0x1000, scoped, tag = 'output window, operand 0, single buffered']
    %8 = vsyncpa [#allocation3], 0
    %9 = vsyncpa [#allocation6], 0
    %10 = vsyncpa [#allocation4], 0
    // Predicated region
    $region2: #{tpu_custom_call.1} parent=1 // pred_check
      _
    $region3: #{tpu_custom_call.1} parent=1 // pred_check_branch
      %12 = sbr.rel (0) target = $region5
    $region4: #{tpu_custom_call.1} parent=1 // pred_region
      %s14 = ssub.s32 64, 64
      %15 = vsyncadd [#allocation3], %s14
      %s17 = sshll.u32 [#allocation2], 4
      %s18 = int_to_ptr.vmem [resolvable:$true] %s17
      %20 = dma.hbm_to_vmem [thread:$0]  %s0, 64, %s18, [#allocation3]
    $region5: #{tpu_custom_call.1} parent=1 // pred_fallthru
      _
    // Predicated region
    $region6: #{tpu_custom_call.1} parent=1 // pred_check
      _
    $region7: #{tpu_custom_call.1} parent=1 // pred_check_branch
      %22 = sbr.rel (0) target = $region9
    $region8: #{tpu_custom_call.1} parent=1 // pred_region
      %s24 = ssub.s32 64, 64
      %25 = vsyncadd [#allocation6], %s24
      %s27 = sshll.u32 [#allocation5], 4
      %s28 = int_to_ptr.vmem [resolvable:$true] %s27
      %30 = dma.hbm_to_vmem [thread:$0]  %s1, 64, %s28, [#allocation6]
    $region9: #{tpu_custom_call.1} parent=1 // pred_fallthru
      _
    // Predicated region
    $region10: #{tpu_custom_call.1} parent=1 // pred_check
      _
    $region11: #{tpu_custom_call.1} parent=1 // pred_check_branch
      %32 = sbr.rel (0) target = $region13
    $region12: #{tpu_custom_call.1} parent=1 // pred_region
      _
    $region13: #{tpu_custom_call.1} parent=1 // pred_fallthru
      _
    // Predicated region
    $region14: #{tpu_custom_call.1} parent=1 // pred_check
      _
    $region15: #{tpu_custom_call.1} parent=1 // pred_check_branch
      %34 = sbr.rel (0) target = $region17
    $region16: #{tpu_custom_call.1} parent=1 // pred_region
      %35 = dma.done [#allocation3], 64
    $region17: #{tpu_custom_call.1} parent=1 // pred_fallthru
      _
    // Predicated region
    $region18: #{tpu_custom_call.1} parent=1 // pred_check
      _
    $region19: #{tpu_custom_call.1} parent=1 // pred_check_branch
      %37 = sbr.rel (0) target = $region21
    $region20: #{tpu_custom_call.1} parent=1 // pred_region
      %38 = dma.done [#allocation6], 64
    $region21: #{tpu_custom_call.1} parent=1 // pred_fallthru
      _
    %v40 = vld [vmem:[#allocation5] sm:$0xf]
    %v41 = vld [vmem:[%s2] sm:$0xf]
    %v42 = vld [vmem:[#allocation2] sm:$0xf]
    %v43 = vunpack.c.l.bf16 %v42
    %vm44 = vcmask 64512
    %v46 = vsel %vm44, %v40, 0
    %vm48 = vcmask 1043456
    %v50 = vsel %vm48, %v41, 0
    %52 = vmatprep.subr.bf16.mxu0 0
    %53 = vmatpush1.bf16.msra.mxu0 %v50
    %54 = vmatprep.subr.bf16.mxu0 0
    %55 = vmatpush1.bf16.msra.mxu0 0
    %56 = vmatprep.subr.bf16.mxu0 0
    %57 = vmatpush1.bf16.msra.mxu0 0
    %58 = vmatprep.subr.bf16.mxu0 0
    %59 = vmatpush1.bf16.msra.mxu0 0
    %60 = vmatprep.subr.bf16.mxu0 0
    %61 = vmatpush1.bf16.msra.mxu0 0
    %62 = vmatprep.subr.bf16.mxu0 0
    %63 = vmatpush1.bf16.msra.mxu0 0
    %64 = vmatprep.subr.bf16.mxu0 0
    %65 = vmatpush1.bf16.msra.mxu0 0
    %66 = vmatprep.subr.bf16.mxu0 0
    %67 = vmatpush1.bf16.msra.mxu0 0
    %68 = vmatprep.subr.bf16.mxu0 0
    %69 = vmatpush1.bf16.msra.mxu0 0
    %70 = vmatprep.subr.bf16.mxu0 0
    %71 = vmatpush1.bf16.msra.mxu0 0
    %72 = vmatprep.subr.bf16.mxu0 0
    %73 = vmatpush1.bf16.msra.mxu0 0
    %74 = vmatprep.subr.bf16.mxu0 0
    %75 = vmatpush1.bf16.msra.mxu0 0
    %76 = vmatprep.subr.bf16.mxu0 0
    %77 = vmatpush1.bf16.msra.mxu0 0
    %78 = vmatprep.subr.bf16.mxu0 0
    %79 = vmatpush1.bf16.msra.mxu0 0
    %80 = vmatprep.subr.bf16.mxu0 0
    %81 = vmatpush1.bf16.msra.mxu0 0
    %82 = vmatprep.subr.bf16.mxu0 0
    %83 = vmatpush1.bf16.msra.mxu0 0
    %84 = vmatprep.mubr.bf16.mxu0 0
    %85 = vmatmul.mubr.bf16.gmra.mrb[0].mxu0 %v46
    %v86 = vpop.f32.mrb[0].mxu0
    %v87 = vadd.f32 %v43, %v86
    %v88 = vpop.f32.mrb[0].mxu0
    %v89 = vpop.f32.mrb[0].mxu0
    %v90 = vpop.f32.mrb[0].mxu0
    %91 = vdwg.mxu0
    %92 = vst [vmem:[#allocation7] sm:$0xff] %v87
    // Predicated region
    $region22: #{tpu_custom_call.1} parent=1 // pred_check
      _
    $region23: #{tpu_custom_call.1} parent=1 // pred_check_branch
      %94 = sbr.rel (0) target = $region25
    $region24: #{tpu_custom_call.1} parent=1 // pred_region
      %s96 = ssub.s32 128, 128
      %97 = vsyncadd [#allocation4], %s96
      %s99 = sshll.u32 [#allocation7], 4
      %s100 = int_to_ptr.vmem [resolvable:$true] %s99
      %102 = dma.vmem_to_hbm [thread:$0]  %s100, 128, %s3, [#allocation4]
    $region25: #{tpu_custom_call.1} parent=1 // pred_fallthru
      _
    // Predicated region
    $region26: #{tpu_custom_call.1} parent=1 // pred_check
      _
    $region27: #{tpu_custom_call.1} parent=1 // pred_check_branch
      %104 = sbr.rel (0) target = $region29
    $region28: #{tpu_custom_call.1} parent=1 // pred_region
      %105 = dma.done [#allocation4], 128
    $region29: #{tpu_custom_call.1} parent=1 // pred_fallthru
      _
    %106 = vsyncpa [#allocation3], 1
    %107 = vsyncpa [#allocation6], 1
    %108 = vsyncpa [#allocation4], 1

</llo_original>
